<compile_context>
chip_gen: v7x
topology: tpu7x:2x2x1
jax: 0.10.0
libtpu: 0.0.40
codegen_flags: <defaults>
</compile_context>

<pallas_src>
import functools

import jax
import jax.numpy as jnp
from jax.experimental import pallas as pl
from jax.experimental.pallas import tpu as pltpu

_LANE = 128
_SUBLANE = 8


def _round_up(x, m):
    return ((x + m - 1) // m) * m


@functools.lru_cache(maxsize=1)
def _detect_num_tensorcores():
    """2 on v7x (megacore), 1 on v5e/v6e (and as a safe default)."""
    try:
        kind = jax.devices()[0].device_kind.lower()
    except Exception:  # pragma: no cover - defensive
        return 1
    return 2 if "v7" in kind else 1


def _pick_batch_tile(batch, max_tile, num_cores):
    """Sublane-aligned batch tile.

    Single-TC chips (v5e/v6e): one big tile (extra grid steps only add the
    ~600-cycle per-step pipeline overhead).  v7x: target >= 2 steps per core so
    each core's software pipeline can hide input fetch / output writeback.
    """
    bp = _round_up(max(batch, 1), _SUBLANE)
    if num_cores <= 1:
        return max(_SUBLANE, min(max_tile, bp))
    target_steps = 2 * num_cores
    tile = _round_up(pl.cdiv(bp, target_steps), _SUBLANE)
    return max(_SUBLANE, min(max_tile, tile))


# ----------------------------------------------------------------------------- 
# Kernel
# -----------------------------------------------------------------------------
def _mlp_kernel(x_ref,
                w1_ref, b1_ref,
                w2_ref, b2_ref,
                w3_ref, b3_ref,
                w4_ref, b4_ref,
                o_ref):
    """Fused 4-layer MLP: relu(relu(relu(relu(x@W1+b1)@W2+b2)@W3+b3)@W4+b4).

    x arrives f32 and is cast to bf16 in-kernel (VPU); W are bf16 (MXU-native);
    accumulation / bias add / ReLU are f32; output stored bf16 (lane-dense).
    """
    h = x_ref[...].astype(jnp.bfloat16)                                   # [tb, obs]

    h = jnp.dot(h, w1_ref[...], preferred_element_type=jnp.float32) + b1_ref[...]
    h = jnp.maximum(h, 0.0).astype(jnp.bfloat16)                          # [tb, 32]

    h = jnp.dot(h, w2_ref[...], preferred_element_type=jnp.float32) + b2_ref[...]
    h = jnp.maximum(h, 0.0).astype(jnp.bfloat16)                          # [tb, 64]

    h = jnp.dot(h, w3_ref[...], preferred_element_type=jnp.float32) + b3_ref[...]
    h = jnp.maximum(h, 0.0).astype(jnp.bfloat16)                          # [tb, 16]

    h = jnp.dot(h, w4_ref[...], preferred_element_type=jnp.float32) + b4_ref[...]
    o_ref[...] = jnp.maximum(h, 0.0).astype(jnp.bfloat16)                 # [tb, 128]


# -----------------------------------------------------------------------------
# Parameter preparation (one-time, hoisted out of the per-call path)
# -----------------------------------------------------------------------------
def prepare_params(params):
    """Convert f32 [in, out] weights / [1, out] biases into kernel operands.

    Call once and reuse across forward calls: this hoists the bf16 casts and
    the 128-lane padding of the last layer out of the per-call path.
    Returns (prepared_arrays_tuple, action_num).
    """
    (w1, b1), (w2, b2), (w3, b3), (w4, b4) = params
    obs_num = w1.shape[0]
    action_num = w4.shape[1]
    # Fail loudly instead of silently truncating / blowing VMEM.
    assert action_num <= _LANE, f"action_num={action_num} must be <= {_LANE}"
    assert obs_num <= 2048, f"obs_num={obs_num} too large for a single block"

    w4p = jnp.zeros((w4.shape[0], _LANE), jnp.bfloat16).at[:, :action_num].set(
        w4.astype(jnp.bfloat16))
    b4p = jnp.zeros((1, _LANE), jnp.float32).at[:, :action_num].set(
        b4.reshape(1, -1).astype(jnp.float32))

    prepared = (
        w1.astype(jnp.bfloat16), b1.reshape(1, -1).astype(jnp.float32),
        w2.astype(jnp.bfloat16), b2.reshape(1, -1).astype(jnp.float32),
        w3.astype(jnp.bfloat16), b3.reshape(1, -1).astype(jnp.float32),
        w4p, b4p,
    )
    return prepared, action_num


# -----------------------------------------------------------------------------
# Pallas forward
# -----------------------------------------------------------------------------
@functools.partial(jax.jit,
                   static_argnames=("action_num", "max_tile", "num_cores"))
def _mlp_forward_pallas_jit(x, prepared, *, action_num, max_tile, num_cores):
    w1b, b1, w2b, b2, w3b, b3, w4p, b4p = prepared
    B, obs_num = x.shape

    tb = _pick_batch_tile(B, max_tile, num_cores)
    grid = (pl.cdiv(B, tb),)          # ragged last block handled by Pallas masking

    batch_map = lambda i: (i, 0)
    rep_map = lambda i: (0, 0)        # constant block index -> not re-fetched
    full = lambda a: pl.BlockSpec(a.shape, rep_map)

    # Advisory cost hint for XLA's scheduler around the custom call.
    flops = 2 * B * (obs_num * 32 + 32 * 64 + 64 * 16 + 16 * _LANE)
    weight_bytes = sum(int(a.size) * a.dtype.itemsize
                       for a in (w1b, b1, w2b, b2, w3b, b3, w4p, b4p))
    bytes_accessed = B * obs_num * 4 + B * _LANE * 2 + weight_bytes
    cost = pl.CostEstimate(flops=flops, transcendentals=0,
                           bytes_accessed=bytes_accessed)

    out = pl.pallas_call(
        _mlp_kernel,
        out_shape=jax.ShapeDtypeStruct((B, _LANE), jnp.bfloat16),
        grid_spec=pltpu.PrefetchScalarGridSpec(
            num_scalar_prefetch=0,
            grid=grid,
            in_specs=[
                pl.BlockSpec((tb, obs_num), batch_map),   # x tile (batch-tiled)
                full(w1b), full(b1),
                full(w2b), full(b2),
                full(w3b), full(b3),
                full(w4p), full(b4p),
            ],
            out_specs=pl.BlockSpec((tb, _LANE), batch_map),
        ),
        compiler_params=pltpu.CompilerParams(
            dimension_semantics=("parallel",),
            # Footprint at tb=4096 is a few MiB; explicit limit documents the
            # budget and is safe on v7x's smaller (64 MiB physical) VMEM.
            vmem_limit_bytes=32 * 1024 * 1024),
        cost_estimate=cost,
    )(x, w1b, b1, w2b, b2, w3b, b3, w4p, b4p)

    return out[:, :action_num].astype(jnp.float32)


def mlp_forward_pallas(x, prepared, action_num, *, max_tile=4096):
    """Fused Pallas forward.  x: [B, obs_num] f32.  Returns [B, action_num] f32."""
    return _mlp_forward_pallas_jit(
        x, prepared, action_num=action_num, max_tile=max_tile,
        num_cores=_detect_num_tensorcores())


@jax.jit
def mlp_forward_xla(x, params):
    """Plain-XLA fallback for tiny batches (same bf16 math as the kernel,
    including the final bf16 rounding of the output)."""
    h = x.astype(jnp.bfloat16)
    for (w, b) in params:
        h = jnp.dot(h, w.astype(jnp.bfloat16),
                    preferred_element_type=jnp.float32) + b.reshape(1, -1)
        h = jnp.maximum(h, 0.0).astype(jnp.bfloat16)
    return h.astype(jnp.float32)


def mlp_forward(x, params, prepared=None, *, min_pallas_batch=256,
                force_pallas=False, max_tile=4096):
    """Dispatch: fused Pallas kernel for large batches, plain XLA for tiny ones
    (at B=2 a Pallas launch is pure overhead)."""
    if force_pallas or x.shape[0] >= min_pallas_batch:
        if prepared is None:
            prepared = prepare_params(params)
        arrays, action_num = prepared
        return mlp_forward_pallas(x, arrays, action_num, max_tile=max_tile)
    return mlp_forward_xla(x, params)


# -----------------------------------------------------------------------------
# Init + references
# -----------------------------------------------------------------------------
def init_mlp_params(key, obs_num, action_num):
    """torch.nn.Linear default init (U[-1/sqrt(fan_in), +1/sqrt(fan_in)]).

    Weights stored as [in_features, out_features] (transpose of PyTorch layout);
    biases stored as [1, out_features] for 2D broadcast inside the kernel.
    """
    dims = [obs_num, 32, 64, 16, action_num]
    params = []
    for i in range(4):
        fan_in, fan_out = dims[i], dims[i + 1]
        key, kw, kb = jax.random.split(key, 3)
        bound = 1.0 / (fan_in ** 0.5)
        w = jax.random.uniform(kw, (fan_in, fan_out), jnp.float32, -bound, bound)
        b = jax.random.uniform(kb, (1, fan_out), jnp.float32, -bound, bound)
        params.append((w, b))
    return tuple(params)


def mlp_reference_f32(x, params):
    """Pure-f32 reference (mirrors the PyTorch module exactly)."""
    h = x
    for (w, b) in params:
        h = jnp.maximum(jnp.dot(h, w) + b, 0.0)
    return h


if __name__ == "__main__":
    key = jax.random.PRNGKey(0)
    kx, kxl, kp = jax.random.split(key, 3)

    obs_num = 8     # observation dimension
    action_num = 4  # number of actions
    params = init_mlp_params(kp, obs_num, action_num)
    prepared = prepare_params(params)   # one-time weight conversion (hoisted)

    # Small demo batch: force the Pallas path so the kernel itself is exercised
    # (the dispatcher would normally hand B=2 to plain XLA).
    B = 2
    x = jax.random.normal(kx, (B, obs_num), jnp.float32)
    out_small = jax.block_until_ready(
        mlp_forward(x, params, prepared, force_pallas=True))
    ref_small = mlp_forward_xla(x, params)          # same bf16 math as kernel
    assert out_small.shape == (B, action_num), out_small.shape
    assert jnp.allclose(out_small, ref_small, atol=1e-2, rtol=1e-2), (out_small, ref_small)
    assert jnp.allclose(out_small, mlp_reference_f32(x, params),
                        atol=5e-2, rtol=5e-2)

    # Larger batch: single big tile on v5e/v6e; multi-step grid on v7x.
    BL = 512
    xl = jax.random.normal(kxl, (BL, obs_num), jnp.float32)
    out_large = jax.block_until_ready(mlp_forward(xl, params, prepared))
    ref_large = mlp_forward_xla(xl, params)
    assert out_large.shape == (BL, action_num), out_large.shape
    assert jnp.allclose(out_large, ref_large, atol=1e-2, rtol=1e-2)
    assert jnp.allclose(out_large, mlp_reference_f32(xl, params),
                        atol=5e-2, rtol=5e-2)

    # Ragged-batch path (B not a multiple of the sublane/tile): masked last block.
    BR = 300
    xr = jax.random.normal(kxl, (BR, obs_num), jnp.float32)
    out_rag = jax.block_until_ready(
        mlp_forward(xr, params, prepared, force_pallas=True))
    assert out_rag.shape == (BR, action_num), out_rag.shape
    assert jnp.allclose(out_rag, mlp_forward_xla(xr, params), atol=1e-2, rtol=1e-2)

    # Tiny-batch dispatch falls back to plain XLA (no Pallas launch overhead).
    out_xla = jax.block_until_ready(mlp_forward(x, params, prepared))
    assert jnp.allclose(out_xla, ref_small, atol=1e-6, rtol=1e-6)

    print("KERNEL_OK")
</pallas_src>

<mosaic_0001>
module attributes {stable_mosaic.version = 11 : i64} {
  func.func @_mlp_kernel(%arg0: i32, %arg1: memref<8x8xf32, #tpu.memory_space<vmem>>, %arg2: memref<8x32xbf16, #tpu.memory_space<vmem>>, %arg3: memref<1x32xf32, #tpu.memory_space<vmem>>, %arg4: memref<32x64xbf16, #tpu.memory_space<vmem>>, %arg5: memref<1x64xf32, #tpu.memory_space<vmem>>, %arg6: memref<64x16xbf16, #tpu.memory_space<vmem>>, %arg7: memref<1x16xf32, #tpu.memory_space<vmem>>, %arg8: memref<16x128xbf16, #tpu.memory_space<vmem>>, %arg9: memref<1x128xf32, #tpu.memory_space<vmem>>, %arg10: memref<8x128xbf16, #tpu.memory_space<vmem>>) attributes {dimension_semantics = [#tpu.dimension_semantics<parallel>], iteration_bounds = array<i64: 1>, scalar_prefetch = 0 : i64, scratch_operands = 0 : i64, tpu.core_type = #tpu.core_type<tc>, window_params = [{transform_indices = @transform_0, window_bounds = array<i64: 8, 8>}, {pipeline_mode = #tpu.pipeline_mode<synchronous>, transform_indices = @transform_1, window_bounds = array<i64: 8, 32>}, {pipeline_mode = #tpu.pipeline_mode<synchronous>, transform_indices = @transform_2, window_bounds = array<i64: 1, 32>}, {pipeline_mode = #tpu.pipeline_mode<synchronous>, transform_indices = @transform_3, window_bounds = array<i64: 32, 64>}, {pipeline_mode = #tpu.pipeline_mode<synchronous>, transform_indices = @transform_4, window_bounds = array<i64: 1, 64>}, {pipeline_mode = #tpu.pipeline_mode<synchronous>, transform_indices = @transform_5, window_bounds = array<i64: 64, 16>}, {pipeline_mode = #tpu.pipeline_mode<synchronous>, transform_indices = @transform_6, window_bounds = array<i64: 1, 16>}, {pipeline_mode = #tpu.pipeline_mode<synchronous>, transform_indices = @transform_7, window_bounds = array<i64: 16, 128>}, {pipeline_mode = #tpu.pipeline_mode<synchronous>, transform_indices = @transform_8, window_bounds = array<i64: 1, 128>}, {transform_indices = @transform_9, window_bounds = array<i64: 8, 128>}]} {
    %c0 = arith.constant 0 : index
    %c0_0 = arith.constant 0 : index
    %0 = vector.load %arg1[%c0, %c0_0] : memref<8x8xf32, #tpu.memory_space<vmem>>, vector<8x8xf32>
    %1 = arith.truncf %0 : vector<8x8xf32> to vector<8x8xbf16>
    %c0_1 = arith.constant 0 : index
    %c0_2 = arith.constant 0 : index
    %2 = vector.load %arg2[%c0_1, %c0_2] : memref<8x32xbf16, #tpu.memory_space<vmem>>, vector<8x32xbf16>
    %cst = arith.constant dense<0.000000e+00> : vector<8x32xf32>
    %3 = tpu.matmul %1, %2, %cst {dimension_numbers = #tpu.dot_dimension_numbers<[1], [0], [0], [1], [0, 0, 1, 1], [], []>} : vector<8x8xbf16>, vector<8x32xbf16>, vector<8x32xf32> -> vector<8x32xf32>
    %c0_3 = arith.constant 0 : index
    %c0_4 = arith.constant 0 : index
    %4 = vector.load %arg3[%c0_3, %c0_4] : memref<1x32xf32, #tpu.memory_space<vmem>>, vector<1x32xf32>
    %5 = vector.broadcast %4 : vector<1x32xf32> to vector<8x32xf32>
    %6 = arith.addf %3, %5 : vector<8x32xf32>
    %cst_5 = arith.constant 0.000000e+00 : f32
    %7 = vector.broadcast %cst_5 : f32 to vector<8x32xf32>
    %8 = arith.maximumf %6, %7 : vector<8x32xf32>
    %9 = arith.truncf %8 : vector<8x32xf32> to vector<8x32xbf16>
    %c0_6 = arith.constant 0 : index
    %c0_7 = arith.constant 0 : index
    %10 = vector.load %arg4[%c0_6, %c0_7] : memref<32x64xbf16, #tpu.memory_space<vmem>>, vector<32x64xbf16>
    %cst_8 = arith.constant dense<0.000000e+00> : vector<8x64xf32>
    %11 = tpu.matmul %9, %10, %cst_8 {dimension_numbers = #tpu.dot_dimension_numbers<[1], [0], [0], [1], [0, 0, 1, 1], [], []>} : vector<8x32xbf16>, vector<32x64xbf16>, vector<8x64xf32> -> vector<8x64xf32>
    %c0_9 = arith.constant 0 : index
    %c0_10 = arith.constant 0 : index
    %12 = vector.load %arg5[%c0_9, %c0_10] : memref<1x64xf32, #tpu.memory_space<vmem>>, vector<1x64xf32>
    %13 = vector.broadcast %12 : vector<1x64xf32> to vector<8x64xf32>
    %14 = arith.addf %11, %13 : vector<8x64xf32>
    %cst_11 = arith.constant 0.000000e+00 : f32
    %15 = vector.broadcast %cst_11 : f32 to vector<8x64xf32>
    %16 = arith.maximumf %14, %15 : vector<8x64xf32>
    %17 = arith.truncf %16 : vector<8x64xf32> to vector<8x64xbf16>
    %c0_12 = arith.constant 0 : index
    %c0_13 = arith.constant 0 : index
    %18 = vector.load %arg6[%c0_12, %c0_13] : memref<64x16xbf16, #tpu.memory_space<vmem>>, vector<64x16xbf16>
    %cst_14 = arith.constant dense<0.000000e+00> : vector<8x16xf32>
    %19 = tpu.matmul %17, %18, %cst_14 {dimension_numbers = #tpu.dot_dimension_numbers<[1], [0], [0], [1], [0, 0, 1, 1], [], []>} : vector<8x64xbf16>, vector<64x16xbf16>, vector<8x16xf32> -> vector<8x16xf32>
    %c0_15 = arith.constant 0 : index
    %c0_16 = arith.constant 0 : index
    %20 = vector.load %arg7[%c0_15, %c0_16] : memref<1x16xf32, #tpu.memory_space<vmem>>, vector<1x16xf32>
    %21 = vector.broadcast %20 : vector<1x16xf32> to vector<8x16xf32>
    %22 = arith.addf %19, %21 : vector<8x16xf32>
    %cst_17 = arith.constant 0.000000e+00 : f32
    %23 = vector.broadcast %cst_17 : f32 to vector<8x16xf32>
    %24 = arith.maximumf %22, %23 : vector<8x16xf32>
    %25 = arith.truncf %24 : vector<8x16xf32> to vector<8x16xbf16>
    %c0_18 = arith.constant 0 : index
    %c0_19 = arith.constant 0 : index
    %26 = vector.load %arg8[%c0_18, %c0_19] : memref<16x128xbf16, #tpu.memory_space<vmem>>, vector<16x128xbf16>
    %cst_20 = arith.constant dense<0.000000e+00> : vector<8x128xf32>
    %27 = tpu.matmul %25, %26, %cst_20 {dimension_numbers = #tpu.dot_dimension_numbers<[1], [0], [0], [1], [0, 0, 1, 1], [], []>} : vector<8x16xbf16>, vector<16x128xbf16>, vector<8x128xf32> -> vector<8x128xf32>
    %c0_21 = arith.constant 0 : index
    %c0_22 = arith.constant 0 : index
    %28 = vector.load %arg9[%c0_21, %c0_22] : memref<1x128xf32, #tpu.memory_space<vmem>>, vector<1x128xf32>
    %29 = vector.broadcast %28 : vector<1x128xf32> to vector<8x128xf32>
    %30 = arith.addf %27, %29 : vector<8x128xf32>
    %cst_23 = arith.constant 0.000000e+00 : f32
    %31 = vector.broadcast %cst_23 : f32 to vector<8x128xf32>
    %32 = arith.maximumf %30, %31 : vector<8x128xf32>
    %33 = arith.truncf %32 : vector<8x128xf32> to vector<8x128xbf16>
    %c0_24 = arith.constant 0 : index
    %c0_25 = arith.constant 0 : index
    %34 = vector.load %arg10[%c0_24, %c0_25] : memref<8x128xbf16, #tpu.memory_space<vmem>>, vector<8x128xbf16>
    tpu.vector_store %arg10[%c0_24, %c0_25], %33 {strides = array<i32>} : memref<8x128xbf16, #tpu.memory_space<vmem>>, vector<8x128xbf16>,
    return
  }
  func.func @transform_0(%arg0: i32) -> (i32, i32) {
    %c0_i32 = arith.constant 0 : i32
    %c0_i32_0 = arith.constant 0 : i32
    return %arg0, %c0_i32 : i32, i32
  }
  func.func @transform_1(%arg0: i32) -> (i32, i32) {
    %c0_i32 = arith.constant 0 : i32
    %c0_i32_0 = arith.constant 0 : i32
    %c0_i32_1 = arith.constant 0 : i32
    return %c0_i32, %c0_i32_0 : i32, i32
  }
  func.func @transform_2(%arg0: i32) -> (i32, i32) {
    %c0_i32 = arith.constant 0 : i32
    %c0_i32_0 = arith.constant 0 : i32
    %c0_i32_1 = arith.constant 0 : i32
    return %c0_i32, %c0_i32_0 : i32, i32
  }
  func.func @transform_3(%arg0: i32) -> (i32, i32) {
    %c0_i32 = arith.constant 0 : i32
    %c0_i32_0 = arith.constant 0 : i32
    %c0_i32_1 = arith.constant 0 : i32
    return %c0_i32, %c0_i32_0 : i32, i32
  }
  func.func @transform_4(%arg0: i32) -> (i32, i32) {
    %c0_i32 = arith.constant 0 : i32
    %c0_i32_0 = arith.constant 0 : i32
    %c0_i32_1 = arith.constant 0 : i32
    return %c0_i32, %c0_i32_0 : i32, i32
  }
  func.func @transform_5(%arg0: i32) -> (i32, i32) {
    %c0_i32 = arith.constant 0 : i32
    %c0_i32_0 = arith.constant 0 : i32
    %c0_i32_1 = arith.constant 0 : i32
    return %c0_i32, %c0_i32_0 : i32, i32
  }
  func.func @transform_6(%arg0: i32) -> (i32, i32) {
    %c0_i32 = arith.constant 0 : i32
    %c0_i32_0 = arith.constant 0 : i32
    %c0_i32_1 = arith.constant 0 : i32
    return %c0_i32, %c0_i32_0 : i32, i32
  }
  func.func @transform_7(%arg0: i32) -> (i32, i32) {
    %c0_i32 = arith.constant 0 : i32
    %c0_i32_0 = arith.constant 0 : i32
    %c0_i32_1 = arith.constant 0 : i32
    return %c0_i32, %c0_i32_0 : i32, i32
  }
  func.func @transform_8(%arg0: i32) -> (i32, i32) {
    %c0_i32 = arith.constant 0 : i32
    %c0_i32_0 = arith.constant 0 : i32
    %c0_i32_1 = arith.constant 0 : i32
    return %c0_i32, %c0_i32_0 : i32, i32
  }
  func.func @transform_9(%arg0: i32) -> (i32, i32) {
    %c0_i32 = arith.constant 0 : i32
    %c0_i32_0 = arith.constant 0 : i32
    return %arg0, %c0_i32 : i32, i32
  }
}

</mosaic_0001>

<llo_original>
// kernel: _mlp_forward_pallas_jit.1
$region0: #{_mlp_forward_pallas_jit.1}
  #allocation0 [shape = 'u32[]', space=smem, size = 0x4, offset = 0x4, fixed_abs, tag = 'smem constant byte address 0x4 - core index']
  #allocation1 [shape = 'u32[144,128]{1,0:T(1,128)}', space=vmem, size = 0x12000, scoped, tag = 'internal scratch']
  %s0 = inlined_call_operand.vmem [shape: f32[2,8], index: 0, kind: input, shape index: {}]
  %s1 = inlined_call_operand.vmem [shape: bf16[8,32], index: 1, kind: input, shape index: {}]
  %s2 = inlined_call_operand.vmem [shape: f32[1,32], index: 2, kind: input, shape index: {}]
  %s3 = inlined_call_operand.vmem [shape: bf16[32,64], index: 3, kind: input, shape index: {}]
  %s4 = inlined_call_operand.vmem [shape: f32[1,64], index: 4, kind: input, shape index: {}]
  %s5 = inlined_call_operand.vmem [shape: bf16[64,16], index: 5, kind: input, shape index: {}]
  %s6 = inlined_call_operand.vmem [shape: f32[1,16], index: 6, kind: input, shape index: {}]
  %s7 = inlined_call_operand.vmem [shape: bf16[16,128], index: 7, kind: input, shape index: {}]
  %s8 = inlined_call_operand.vmem [shape: f32[1,128], index: 8, kind: input, shape index: {}]
  %s9 = inlined_call_operand.vmem [shape: bf16[2,128], index: 9, kind: output, shape index: {}]
  %s10 = sld [smem:[#allocation0]]
  $region76: #{_mlp_forward_pallas_jit.1} parent=0
    _
  %s12 = ssub.s32 1, %s10
  %s13 = scalar_select 0, %s12, %s10
  $region1: #{_mlp_forward_pallas_jit.1} parent=0
    #allocation2 [shape = 'u8[2048]{0}', space=vmem, size = 0x800, scoped, tag = 'output window, operand 0, single buffered']
    // Predicated region
    $region2: #{_mlp_forward_pallas_jit.1} parent=1 // pred_check
      _
    $region3: #{_mlp_forward_pallas_jit.1} parent=1 // pred_check_branch
      %15 = sbr.rel (0) target = $region5
    $region4: #{_mlp_forward_pallas_jit.1} parent=1 // pred_region
      _
    $region5: #{_mlp_forward_pallas_jit.1} parent=1 // pred_fallthru
      _
    // Predicated region
    $region6: #{_mlp_forward_pallas_jit.1} parent=1 // pred_check
      _
    $region7: #{_mlp_forward_pallas_jit.1} parent=1 // pred_check_branch
      %17 = sbr.rel (0) target = $region9
    $region8: #{_mlp_forward_pallas_jit.1} parent=1 // pred_region
      _
    $region9: #{_mlp_forward_pallas_jit.1} parent=1 // pred_fallthru
      _
    // Predicated region
    $region10: #{_mlp_forward_pallas_jit.1} parent=1 // pred_check
      _
    $region11: #{_mlp_forward_pallas_jit.1} parent=1 // pred_check_branch
      %19 = sbr.rel (0) target = $region13
    $region12: #{_mlp_forward_pallas_jit.1} parent=1 // pred_region
      _
    $region13: #{_mlp_forward_pallas_jit.1} parent=1 // pred_fallthru
      _
    // Predicated region
    $region14: #{_mlp_forward_pallas_jit.1} parent=1 // pred_check
      _
    $region15: #{_mlp_forward_pallas_jit.1} parent=1 // pred_check_branch
      %21 = sbr.rel (0) target = $region17
    $region16: #{_mlp_forward_pallas_jit.1} parent=1 // pred_region
      _
    $region17: #{_mlp_forward_pallas_jit.1} parent=1 // pred_fallthru
      _
    // Predicated region
    $region18: #{_mlp_forward_pallas_jit.1} parent=1 // pred_check
      _
    $region19: #{_mlp_forward_pallas_jit.1} parent=1 // pred_check_branch
      %23 = sbr.rel (0) target = $region21
    $region20: #{_mlp_forward_pallas_jit.1} parent=1 // pred_region
      _
    $region21: #{_mlp_forward_pallas_jit.1} parent=1 // pred_fallthru
      _
    // Predicated region
    $region22: #{_mlp_forward_pallas_jit.1} parent=1 // pred_check
      _
    $region23: #{_mlp_forward_pallas_jit.1} parent=1 // pred_check_branch
      %25 = sbr.rel (0) target = $region25
    $region24: #{_mlp_forward_pallas_jit.1} parent=1 // pred_region
      _
    $region25: #{_mlp_forward_pallas_jit.1} parent=1 // pred_fallthru
      _
    // Predicated region
    $region26: #{_mlp_forward_pallas_jit.1} parent=1 // pred_check
      _
    $region27: #{_mlp_forward_pallas_jit.1} parent=1 // pred_check_branch
      %27 = sbr.rel (0) target = $region29
    $region28: #{_mlp_forward_pallas_jit.1} parent=1 // pred_region
      _
    $region29: #{_mlp_forward_pallas_jit.1} parent=1 // pred_fallthru
      _
    // Predicated region
    $region30: #{_mlp_forward_pallas_jit.1} parent=1 // pred_check
      _
    $region31: #{_mlp_forward_pallas_jit.1} parent=1 // pred_check_branch
      %29 = sbr.rel (0) target = $region33
    $region32: #{_mlp_forward_pallas_jit.1} parent=1 // pred_region
      _
    $region33: #{_mlp_forward_pallas_jit.1} parent=1 // pred_fallthru
      _
    // Predicated region
    $region34: #{_mlp_forward_pallas_jit.1} parent=1 // pred_check
      _
    $region35: #{_mlp_forward_pallas_jit.1} parent=1 // pred_check_branch
      %31 = sbr.rel (0) target = $region37
    $region36: #{_mlp_forward_pallas_jit.1} parent=1 // pred_region
      _
    $region37: #{_mlp_forward_pallas_jit.1} parent=1 // pred_fallthru
      _
    %v33 = vld [vmem:[%s0] sm:$0xff]
    %v34 = vpack.c.bf16 %v33, %v33
    %v35 = vld [vmem:[%s1] sm:$0xf]
    %v36 = vld [vmem:[%s2] sm:$0x1]
    %v38 = vlaneseq
    %v39 = vshrl.u32 %v38, 7
    %v40 = vsub.s32 0, %v39
    %v41 = vrot.slane %v36, %v40
    %vm43 = vcmask 64512
    %v45 = vsel %vm43, %v34, 0
    %vm47 = vcmask 1043456
    %v49 = vsel %vm47, %v35, 0
    %51 = vmatprep.subr.bf16.mxu0 0
    %52 = vmatpush1.bf16.msra.mxu0 %v49
    %53 = vmatprep.subr.bf16.mxu0 0
    %54 = vmatpush1.bf16.msra.mxu0 0
    %55 = vmatprep.subr.bf16.mxu0 0
    %56 = vmatpush1.bf16.msra.mxu0 0
    %57 = vmatprep.subr.bf16.mxu0 0
    %58 = vmatpush1.bf16.msra.mxu0 0
    %59 = vmatprep.subr.bf16.mxu0 0
    %60 = vmatpush1.bf16.msra.mxu0 0
    %61 = vmatprep.subr.bf16.mxu0 0
    %62 = vmatpush1.bf16.msra.mxu0 0
    %63 = vmatprep.subr.bf16.mxu0 0
    %64 = vmatpush1.bf16.msra.mxu0 0
    %65 = vmatprep.subr.bf16.mxu0 0
    %66 = vmatpush1.bf16.msra.mxu0 0
    %67 = vmatprep.subr.bf16.mxu0 0
    %68 = vmatpush1.bf16.msra.mxu0 0
    %69 = vmatprep.subr.bf16.mxu0 0
    %70 = vmatpush1.bf16.msra.mxu0 0
    %71 = vmatprep.subr.bf16.mxu0 0
    %72 = vmatpush1.bf16.msra.mxu0 0
    %73 = vmatprep.subr.bf16.mxu0 0
    %74 = vmatpush1.bf16.msra.mxu0 0
    %75 = vmatprep.subr.bf16.mxu0 0
    %76 = vmatpush1.bf16.msra.mxu0 0
    %77 = vmatprep.subr.bf16.mxu0 0
    %78 = vmatpush1.bf16.msra.mxu0 0
    %79 = vmatprep.subr.bf16.mxu0 0
    %80 = vmatpush1.bf16.msra.mxu0 0
    %81 = vmatprep.subr.bf16.mxu0 0
    %82 = vmatpush1.bf16.msra.mxu0 0
    %83 = vmatprep.mubr.bf16.mxu0 0
    %84 = vmatmul.mubr.bf16.gmra.mrb[0].mxu0 %v45
    %v85 = vpop.f32.mrb[0].mxu0
    %v86 = vadd.f32 %v41, %v85
    %v87 = vpop.f32.mrb[0].mxu0
    %v88 = vpop.f32.mrb[0].mxu0
    %v89 = vpop.f32.mrb[0].mxu0
    %90 = vdwg.mxu0
    %v91 = vmax.f32 %v86, 0.0
    %v92 = vpack.c.bf16 %v91, %v91
    %v93 = vld [vmem:[%s3] sm:$0xf]
    %v94 = vld [vmem:[%s3 + $0x4] sm:$0xf]
    %v95 = vld [vmem:[%s3 + $0x8] sm:$0xf]
    %v96 = vld [vmem:[%s3 + $0xc] sm:$0xf]
    %v97 = vld [vmem:[%s4] sm:$0x1]
    %v99 = vlaneseq
    %v100 = vshrl.u32 %v99, 7
    %v101 = vsub.s32 0, %v100
    %v102 = vrot.slane %v97, %v101
    %v108 = vunpack.c.l.b16 %v93
    %v109 = vunpack.c.l.b16 %v94
    %v110 = vunpack.c.l.b16 %v95
    %v111 = vunpack.c.l.b16 %v96
    %v112 = vpack.c.b16 %v109, %v108
    %v113 = vpack.c.b16 %v111, %v110
    %vm116 = vcmask 261120
    %v118 = vsel %vm116, %v92, 0
    %120 = vmatprep.subr.bf16.mxu0 0
    %121 = vmatpush1.bf16.msra.mxu0 %v112
    %122 = vmatprep.subr.bf16.mxu0 0
    %123 = vmatpush1.bf16.msra.mxu0 %v113
    %124 = vmatprep.subr.bf16.mxu0 0
    %125 = vmatpush1.bf16.msra.mxu0 0
    %126 = vmatprep.subr.bf16.mxu0 0
    %127 = vmatpush1.bf16.msra.mxu0 0
    %128 = vmatprep.subr.bf16.mxu0 0
    %129 = vmatpush1.bf16.msra.mxu0 0
    %130 = vmatprep.subr.bf16.mxu0 0
    %131 = vmatpush1.bf16.msra.mxu0 0
    %132 = vmatprep.subr.bf16.mxu0 0
    %133 = vmatpush1.bf16.msra.mxu0 0
    %134 = vmatprep.subr.bf16.mxu0 0
    %135 = vmatpush1.bf16.msra.mxu0 0
    %136 = vmatprep.subr.bf16.mxu0 0
    %137 = vmatpush1.bf16.msra.mxu0 0
    %138 = vmatprep.subr.bf16.mxu0 0
    %139 = vmatpush1.bf16.msra.mxu0 0
    %140 = vmatprep.subr.bf16.mxu0 0
    %141 = vmatpush1.bf16.msra.mxu0 0
    %142 = vmatprep.subr.bf16.mxu0 0
    %143 = vmatpush1.bf16.msra.mxu0 0
    %144 = vmatprep.subr.bf16.mxu0 0
    %145 = vmatpush1.bf16.msra.mxu0 0
    %146 = vmatprep.subr.bf16.mxu0 0
    %147 = vmatpush1.bf16.msra.mxu0 0
    %148 = vmatprep.subr.bf16.mxu0 0
    %149 = vmatpush1.bf16.msra.mxu0 0
    %150 = vmatprep.subr.bf16.mxu0 0
    %151 = vmatpush1.bf16.msra.mxu0 0
    %152 = vmatprep.mubr.bf16.mxu0 0
    %153 = vmatmul.mubr.bf16.gmra.mrb[0].mxu0 %v118
    %v154 = vpop.f32.mrb[0].mxu0
    %v155 = vadd.f32 %v102, %v154
    %v156 = vpop.f32.mrb[0].mxu0
    %v157 = vpop.f32.mrb[0].mxu0
    %v158 = vpop.f32.mrb[0].mxu0
    %159 = vdwg.mxu0
    %v160 = vmax.f32 %v155, 0.0
    %v161 = vpack.c.bf16 %v160, %v160
    %v162 = vld [vmem:[%s5] sm:$0xf]
    %v163 = vld [vmem:[%s5 + $0x4] sm:$0xf]
    %v164 = vld [vmem:[%s5 + $0x8] sm:$0xf]
    %v165 = vld [vmem:[%s5 + $0xc] sm:$0xf]
    %v166 = vld [vmem:[%s5 + $0x10] sm:$0xf]
    %v167 = vld [vmem:[%s5 + $0x14] sm:$0xf]
    %v168 = vld [vmem:[%s5 + $0x18] sm:$0xf]
    %v169 = vld [vmem:[%s5 + $0x1c] sm:$0xf]
    %v170 = vld [vmem:[%s6] sm:$0x1]
    %v172 = vlaneseq
    %v173 = vshrl.u32 %v172, 7
    %v174 = vsub.s32 0, %v173
    %v175 = vrot.slane %v170, %v174
    %v185 = vunpack.c.l.b16 %v162
    %v186 = vunpack.c.l.b16 %v163
    %v187 = vunpack.c.l.b16 %v164
    %v188 = vunpack.c.l.b16 %v165
    %v189 = vunpack.c.l.b16 %v166
    %v190 = vunpack.c.l.b16 %v167
    %v191 = vunpack.c.l.b16 %v168
    %v192 = vunpack.c.l.b16 %v169
    %v193 = vpack.c.b16 %v186, %v185
    %v194 = vpack.c.b16 %v188, %v187
    %v195 = vpack.c.b16 %v190, %v189
    %v196 = vpack.c.b16 %v192, %v191
    %vm201 = vcmask 523264
    %v203 = vsel %vm201, %v161, 0
    %205 = vmatprep.subr.bf16.mxu0 0
    %206 = vmatpush1.bf16.msra.mxu0 %v193
    %207 = vmatprep.subr.bf16.mxu0 0
    %208 = vmatpush1.bf16.msra.mxu0 %v194
    %209 = vmatprep.subr.bf16.mxu0 0
    %210 = vmatpush1.bf16.msra.mxu0 %v195
    %211 = vmatprep.subr.bf16.mxu0 0
    %212 = vmatpush1.bf16.msra.mxu0 %v196
    %213 = vmatprep.subr.bf16.mxu0 0
    %214 = vmatpush1.bf16.msra.mxu0 0
    %215 = vmatprep.subr.bf16.mxu0 0
    %216 = vmatpush1.bf16.msra.mxu0 0
    %217 = vmatprep.subr.bf16.mxu0 0
    %218 = vmatpush1.bf16.msra.mxu0 0
    %219 = vmatprep.subr.bf16.mxu0 0
    %220 = vmatpush1.bf16.msra.mxu0 0
    %221 = vmatprep.subr.bf16.mxu0 0
    %222 = vmatpush1.bf16.msra.mxu0 0
    %223 = vmatprep.subr.bf16.mxu0 0
    %224 = vmatpush1.bf16.msra.mxu0 0
    %225 = vmatprep.subr.bf16.mxu0 0
    %226 = vmatpush1.bf16.msra.mxu0 0
    %227 = vmatprep.subr.bf16.mxu0 0
    %228 = vmatpush1.bf16.msra.mxu0 0
    %229 = vmatprep.subr.bf16.mxu0 0
    %230 = vmatpush1.bf16.msra.mxu0 0
    %231 = vmatprep.subr.bf16.mxu0 0
    %232 = vmatpush1.bf16.msra.mxu0 0
    %233 = vmatprep.subr.bf16.mxu0 0
    %234 = vmatpush1.bf16.msra.mxu0 0
    %235 = vmatprep.subr.bf16.mxu0 0
    %236 = vmatpush1.bf16.msra.mxu0 0
    %237 = vmatprep.mubr.bf16.mxu0 0
    %238 = vmatmul.mubr.bf16.gmra.mrb[0].mxu0 %v203
    %v239 = vpop.f32.mrb[0].mxu0
    %v240 = vadd.f32 %v175, %v239
    %v241 = vpop.f32.mrb[0].mxu0
    %v242 = vpop.f32.mrb[0].mxu0
    %v243 = vpop.f32.mrb[0].mxu0
    %244 = vdwg.mxu0
    %v245 = vmax.f32 %v240, 0.0
    %v246 = vpack.c.bf16 %v245, %v245
    %v247 = vld [vmem:[%s7] sm:$0xf]
    %v248 = vld [vmem:[%s7 + $0x4] sm:$0xf]
    %v249 = vld [vmem:[%s8] sm:$0x1]
    %v251 = vlaneseq
    %v252 = vshrl.u32 %v251, 7
    %v253 = vsub.s32 0, %v252
    %v254 = vrot.slane %v249, %v253
    %v258 = vunpack.c.l.b16 %v247
    %v259 = vunpack.c.l.b16 %v248
    %v260 = vpack.c.b16 %v259, %v258
    %vm262 = vcmask 130048
    %v264 = vsel %vm262, %v246, 0
    %266 = vmatprep.subr.bf16.mxu0 0
    %267 = vmatpush1.bf16.msra.mxu0 %v260
    %268 = vmatprep.subr.bf16.mxu0 0
    %269 = vmatpush1.bf16.msra.mxu0 0
    %270 = vmatprep.subr.bf16.mxu0 0
    %271 = vmatpush1.bf16.msra.mxu0 0
    %272 = vmatprep.subr.bf16.mxu0 0
    %273 = vmatpush1.bf16.msra.mxu0 0
    %274 = vmatprep.subr.bf16.mxu0 0
    %275 = vmatpush1.bf16.msra.mxu0 0
    %276 = vmatprep.subr.bf16.mxu0 0
    %277 = vmatpush1.bf16.msra.mxu0 0
    %278 = vmatprep.subr.bf16.mxu0 0
    %279 = vmatpush1.bf16.msra.mxu0 0
    %280 = vmatprep.subr.bf16.mxu0 0
    %281 = vmatpush1.bf16.msra.mxu0 0
    %282 = vmatprep.subr.bf16.mxu0 0
    %283 = vmatpush1.bf16.msra.mxu0 0
    %284 = vmatprep.subr.bf16.mxu0 0
    %285 = vmatpush1.bf16.msra.mxu0 0
    %286 = vmatprep.subr.bf16.mxu0 0
    %287 = vmatpush1.bf16.msra.mxu0 0
    %288 = vmatprep.subr.bf16.mxu0 0
    %289 = vmatpush1.bf16.msra.mxu0 0
    %290 = vmatprep.subr.bf16.mxu0 0
    %291 = vmatpush1.bf16.msra.mxu0 0
    %292 = vmatprep.subr.bf16.mxu0 0
    %293 = vmatpush1.bf16.msra.mxu0 0
    %294 = vmatprep.subr.bf16.mxu0 0
    %295 = vmatpush1.bf16.msra.mxu0 0
    %296 = vmatprep.subr.bf16.mxu0 0
    %297 = vmatpush1.bf16.msra.mxu0 0
    %298 = vmatprep.mubr.bf16.mxu0 0
    %299 = vmatmul.mubr.bf16.gmra.mrb[0].mxu0 %v264
    %v300 = vpop.f32.mrb[0].mxu0
    %v301 = vadd.f32 %v254, %v300
    %v302 = vpop.f32.mrb[0].mxu0
    %v303 = vpop.f32.mrb[0].mxu0
    %v304 = vpop.f32.mrb[0].mxu0
    %305 = vdwg.mxu0
    %v306 = vmax.f32 %v301, 0.0
    %v307 = vpack.c.bf16 %v306, %v306
    %v310 = vunpack.c.l.s4 1966171168
    %v311 = vunpack.c.0.s8 %v310
    %v312 = vlaneseq
    %v313 = vshrl.u32 %v312, 7
    %v314 = vsub.s32 %v311, %v313
    %v315 = vrot.slane %v307, %v314
    %v316 = vcombine.high %v315, %v315
    %v318 = vunpack.c.l.s4 1966171168
    %v319 = vunpack.c.0.s8 %v318
    %v320 = vlaneseq
    %v321 = vshrl.u32 %v320, 7
    %v322 = vsub.s32 %v319, %v321
    %v323 = vrot.slane %v315, %v322
    %v325 = vunpack.c.l.s4 1966171168
    %v326 = vunpack.c.0.s8 %v325
    %v327 = vlaneseq
    %v328 = vshrl.u32 %v327, 7
    %v329 = vsub.s32 %v326, %v328
    %v330 = vrot.slane %v316, %v329
    %v331 = vcombine.high %v323, %v323
    %v332 = vcombine.high %v330, %v330
    %337 = vst [vmem:[#allocation2] sm:$0x1] %v323
    %338 = vst [vmem:[#allocation2 + $0x1] sm:$0x1] %v330
    %339 = vst [vmem:[#allocation2 + $0x2] sm:$0x1] %v331
    %340 = vst [vmem:[#allocation2 + $0x3] sm:$0x1] %v332
    // Predicated region
    $region38: #{_mlp_forward_pallas_jit.1} parent=1 // pred_check
      _
    $region39: #{_mlp_forward_pallas_jit.1} parent=1 // pred_check_branch
      %342 = sbr.rel (0) target = $region41
    $region40: #{_mlp_forward_pallas_jit.1} parent=1 // pred_region
      // Predicated region
      $region42: #{_mlp_forward_pallas_jit.1} parent=40 // pred_check
        _
      $region43: #{_mlp_forward_pallas_jit.1} parent=40 // pred_check_branch
        %344 = sbr.rel (0) target = $region45
      $region44: #{_mlp_forward_pallas_jit.1} parent=40 // pred_region
        // Predicated region
        $region46: #{_mlp_forward_pallas_jit.1} parent=44 // pred_check
          _
        $region47: #{_mlp_forward_pallas_jit.1} parent=44 // pred_check_branch
          %346 = sbr.rel target = $region49
        $region48: #{_mlp_forward_pallas_jit.1} parent=44 // pred_region
          // Predicated region
          $region61: #{_mlp_forward_pallas_jit.1} parent=48 // pred_check
            _
          $region62: #{_mlp_forward_pallas_jit.1} parent=48 // pred_check_branch
            %361 = sbr.rel (0) target = $region64
          $region63: #{_mlp_forward_pallas_jit.1} parent=48 // pred_region
            loop: start=0, step=1, limit=1
            $region65: #{_mlp_forward_pallas_jit.1} parent=63 // loop_pre_header
              _
            $region66: #{_mlp_forward_pallas_jit.1} parent=63 // loop_header
              %s364 = sphi 0, %s368
              %p365 = scmp.ge.s32.totalorder %s364, 1
              %s369 = sphi [#allocation2], [#allocation2]
              %s370 = sphi %s9, %s9
            $region67: #{_mlp_forward_pallas_jit.1} parent=63 // loop_header_branch
              %367 = sbr.rel (%p365) target = $region71
            $region68: #{_mlp_forward_pallas_jit.1} parent=63 // loop_body
              %v371 = vld [vmem:[%s369] sm:$0x1]
              %372 = vst [vmem:[%s370] sm:$0x1] %v371
            $region69: #{_mlp_forward_pallas_jit.1} parent=63 // loop_footer
              %s368 = sadd.s32 1, %s364
            $region70: #{_mlp_forward_pallas_jit.1} parent=63 // loop_footer_branch
              %363 = sbr.rel target = $region66
            $region71: #{_mlp_forward_pallas_jit.1} parent=63 // loop_exit
              _
          $region64: #{_mlp_forward_pallas_jit.1} parent=48 // pred_fallthru
            _
        $region49: #{_mlp_forward_pallas_jit.1} parent=44 // pred_fallthru
          _
        // Predicated region
        $region50: #{_mlp_forward_pallas_jit.1} parent=44 // pred_check
          _
        $region51: #{_mlp_forward_pallas_jit.1} parent=44 // pred_check_branch
          %348 = sbr.rel (0) target = $region53
        $region52: #{_mlp_forward_pallas_jit.1} parent=44 // pred_region
          loop: start=0, step=1, limit=1
          $region54: #{_mlp_forward_pallas_jit.1} parent=52 // loop_pre_header
            _
          $region55: #{_mlp_forward_pallas_jit.1} parent=52 // loop_header
            %s351 = sphi 0, %s355
            %p352 = scmp.ge.s32.totalorder %s351, 1
            %s356 = sphi [#allocation2], [#allocation2]
            %s357 = sphi %s9, %s9
          $region56: #{_mlp_forward_pallas_jit.1} parent=52 // loop_header_branch
            %354 = sbr.rel (%p352) target = $region60
          $region57: #{_mlp_forward_pallas_jit.1} parent=52 // loop_body
            %v358 = vld [vmem:[%s356] sm:$0x1]
            %359 = vst [vmem:[%s357] sm:$0x1] %v358
          $region58: #{_mlp_forward_pallas_jit.1} parent=52 // loop_footer
            %s355 = sadd.s32 1, %s351
          $region59: #{_mlp_forward_pallas_jit.1} parent=52 // loop_footer_branch
            %350 = sbr.rel target = $region55
          $region60: #{_mlp_forward_pallas_jit.1} parent=52 // loop_exit
            _
        $region53: #{_mlp_forward_pallas_jit.1} parent=44 // pred_fallthru
          _
      $region45: #{_mlp_forward_pallas_jit.1} parent=40 // pred_fallthru
        _
      %373 = vnop
    $region41: #{_mlp_forward_pallas_jit.1} parent=1 // pred_fallthru
      _
    // Predicated region
    $region72: #{_mlp_forward_pallas_jit.1} parent=1 // pred_check
      _
    $region73: #{_mlp_forward_pallas_jit.1} parent=1 // pred_check_branch
      %375 = sbr.rel (0) target = $region75
    $region74: #{_mlp_forward_pallas_jit.1} parent=1 // pred_region
      _
    $region75: #{_mlp_forward_pallas_jit.1} parent=1 // pred_fallthru
      _

</llo_original>
